<compile_context>
chip_gen: v7x
topology: tpu7x:2x2x1
jax: 0.10.0
libtpu: 0.0.40
codegen_flags: <defaults>
</compile_context>

<pallas_src>
import jax
import jax.numpy as jnp
from jax.experimental import pallas as pl
from jax.experimental.pallas import tpu as pltpu

EPS = 1e-12  # matches torch F.normalize eps default


def transe_kernel(translated_ref, target_t_ref, dist_ref, score_ref):
    # translated_ref: (B, D, 1)  normalize(tails_emb) + rel_emb (resident, f32)
    # target_t_ref  : (D, TE)    normalized entity-table tile, transposed (TE on lanes)
    # dist_ref      : (B, TE)    L1 distance output tile
    # score_ref     : (B, TE)    1/distance output tile
    tr = translated_ref[...].astype(jnp.float32)        # (B, D, 1)
    tgt_t = target_t_ref[...].astype(jnp.float32)       # (D, TE)

    # diff[b, d, e] = |translated[b, d] - target_n[e, d]|  -- TE on the lane axis,
    # so every sub/abs/add vreg is fully dense; the D reduction is over sublanes.
    diff = jnp.abs(tr - tgt_t[None, :, :])               # (B, D, TE)
    dist = jnp.sum(diff, axis=1)                         # (B, TE)

    dist_ref[...] = dist
    score_ref[...] = 1.0 / dist


def transe_forward(query, tails, entity_embedding, relation_embedding,
                   *, te=512, entity_stream_dtype=None):
    """Non-logical TransEModel.forward. Returns (lerp=None, distance, score)."""
    E, D = entity_embedding.shape
    assert D % 8 == 0, "embed_dim must be a multiple of 8 (pad if not)"

    # ---- plain-JAX glue: gathers + tiny (B, D) math + table normalize/transpose ----
    tails_emb = jnp.take(entity_embedding, tails, axis=0)      # (B, D)
    rel_emb = jnp.take(relation_embedding, query, axis=0)      # (B, D)
    B = tails_emb.shape[0]

    # F.normalize(x, p=2, dim=1): x / max(||x||_2, eps)
    tails_n = tails_emb / jnp.maximum(
        jnp.linalg.norm(tails_emb, axis=1, keepdims=True), EPS)
    translated = (tails_n + rel_emb).astype(jnp.float32)       # (B, D)
    translated3 = translated[:, :, None]                       # (B, D, 1)

    # Normalize entity rows and transpose so the kernel streams lane-dense tiles.
    target_n = entity_embedding / jnp.maximum(
        jnp.linalg.norm(entity_embedding, axis=1, keepdims=True), EPS)
    target_t = target_n.T                                      # (D, E)
    if entity_stream_dtype is not None:
        target_t = target_t.astype(entity_stream_dtype)        # e.g. bf16 on v5e/v6e

    # ---- tiling ----
    te = min(te, E)
    assert E % te == 0, "num_entity must be divisible by the entity tile size"
    assert te % 128 == 0, "entity tile size must be a multiple of 128"
    grid = (E // te,)

    # ---- explicit VMEM budget (v7x has only 64 MiB physical / 32 MiB scoped) ----
    tbytes = jnp.dtype(target_t.dtype).itemsize
    est = (2 * D * te * tbytes        # double-buffered (D, te) input tile
           + 2 * 2 * B * te * 4       # 2 outputs x double-buffered (B, te) tiles
           + 2 * B * D * 4            # resident translated
           + B * D * te * 4)          # (B, D, te) f32 intermediate
    vmem_limit = int(min(32 * 1024 * 1024, max(8 * 1024 * 1024, 4 * est)))

    dist, score = pl.pallas_call(
        transe_kernel,
        out_shape=(
            jax.ShapeDtypeStruct((B, E), jnp.float32),
            jax.ShapeDtypeStruct((B, E), jnp.float32),
        ),
        grid_spec=pltpu.PrefetchScalarGridSpec(
            num_scalar_prefetch=0,
            grid=grid,
            in_specs=[
                pl.BlockSpec((B, D, 1), lambda e: (0, 0, 0)),  # translated (resident)
                pl.BlockSpec((D, te), lambda e: (0, e)),       # entity tile (streamed)
            ],
            out_specs=[
                pl.BlockSpec((B, te), lambda e: (0, e)),       # distance tile
                pl.BlockSpec((B, te), lambda e: (0, e)),       # score tile
            ],
        ),
        compiler_params=pltpu.CompilerParams(
            dimension_semantics=("parallel",),                 # shards E across v7x's 2 TCs
            vmem_limit_bytes=vmem_limit,
        ),
    )(translated3, target_t)

    lerp = None
    return lerp, dist, score


def reference_forward(query, tails, entity_embedding, relation_embedding):
    """Pure-JAX reference mirroring the PyTorch forward (is_logical=False)."""
    tails_emb = jnp.take(entity_embedding, tails, axis=0)
    target = entity_embedding
    tails_emb = tails_emb / jnp.maximum(
        jnp.linalg.norm(tails_emb, axis=1, keepdims=True), EPS)
    target = target / jnp.maximum(
        jnp.linalg.norm(target, axis=1, keepdims=True), EPS)
    rel_emb = jnp.take(relation_embedding, query, axis=0)
    translated = tails_emb + rel_emb
    distance = jnp.sum(jnp.abs(translated[:, None] - target[None]), axis=-1)
    score = 1.0 / distance
    return distance, score


if __name__ == "__main__":
    # Small, module-consistent shapes (E chosen so the default te=512 gives a
    # 2-step grid, exercising the tiling and the megacore-parallel axis).
    num_entity = 1024
    num_relation = 8
    embed_dim = 32
    batch = 8
    init_var = 0.1

    key = jax.random.PRNGKey(0)
    k_ent, k_rel, k_q, k_t = jax.random.split(key, 4)

    # nn.Embedding weights initialized with normal_(0, init_var), as in build_model.
    entity_embedding = init_var * jax.random.normal(
        k_ent, (num_entity, embed_dim), dtype=jnp.float32)
    relation_embedding = init_var * jax.random.normal(
        k_rel, (2 * num_relation, embed_dim), dtype=jnp.float32)

    query = jax.random.randint(k_q, (batch,), 0, 2 * num_relation, dtype=jnp.int32)
    tails = jax.random.randint(k_t, (batch,), 0, num_entity, dtype=jnp.int32)

    lerp, distance, score = transe_forward(
        query, tails, entity_embedding, relation_embedding)
    jax.block_until_ready((distance, score))

    # Correctness check against the pure-JAX reference.
    ref_dist, ref_score = reference_forward(
        query, tails, entity_embedding, relation_embedding)
    assert jnp.allclose(distance, ref_dist, rtol=1e-5, atol=1e-5)
    assert jnp.allclose(score, ref_score, rtol=1e-5, atol=1e-5)

    print("KERNEL_OK")
</pallas_src>

<mosaic_0001>
module attributes {stable_mosaic.version = 11 : i64} {
  func.func @transe_kernel(%arg0: i32, %arg1: memref<8x32x1xf32, #tpu.memory_space<vmem>>, %arg2: memref<32x512xf32, #tpu.memory_space<vmem>>, %arg3: memref<8x512xf32, #tpu.memory_space<vmem>>, %arg4: memref<8x512xf32, #tpu.memory_space<vmem>>) attributes {dimension_semantics = [#tpu.dimension_semantics<parallel>], iteration_bounds = array<i64: 2>, scalar_prefetch = 0 : i64, scratch_operands = 0 : i64, tpu.core_type = #tpu.core_type<tc>, window_params = [{pipeline_mode = #tpu.pipeline_mode<synchronous>, transform_indices = @transform_0, window_bounds = array<i64: 8, 32, 1>}, {transform_indices = @transform_1, window_bounds = array<i64: 32, 512>}, {transform_indices = @transform_2, window_bounds = array<i64: 8, 512>}, {transform_indices = @transform_3, window_bounds = array<i64: 8, 512>}]} {
    %c0 = arith.constant 0 : index
    %c0_0 = arith.constant 0 : index
    %c0_1 = arith.constant 0 : index
    %0 = vector.load %arg1[%c0, %c0_0, %c0_1] : memref<8x32x1xf32, #tpu.memory_space<vmem>>, vector<8x32x1xf32>
    %c0_2 = arith.constant 0 : index
    %c0_3 = arith.constant 0 : index
    %1 = vector.load %arg2[%c0_2, %c0_3] : memref<32x512xf32, #tpu.memory_space<vmem>>, vector<32x512xf32>
    %2 = vector.shape_cast %1 : vector<32x512xf32> to vector<1x32x512xf32>
    %3 = vector.broadcast %0 : vector<8x32x1xf32> to vector<8x32x512xf32>
    %4 = vector.broadcast %2 : vector<1x32x512xf32> to vector<8x32x512xf32>
    %5 = arith.subf %3, %4 : vector<8x32x512xf32>
    %6 = math.absf %5 : vector<8x32x512xf32>
    %cst = arith.constant dense<0.000000e+00> : vector<8x512xf32>
    %7 = vector.multi_reduction <add>, %6, %cst [1] : vector<8x32x512xf32> to vector<8x512xf32>
    %c0_4 = arith.constant 0 : index
    %c0_5 = arith.constant 0 : index
    %8 = vector.load %arg3[%c0_4, %c0_5] : memref<8x512xf32, #tpu.memory_space<vmem>>, vector<8x512xf32>
    tpu.vector_store %arg3[%c0_4, %c0_5], %7 {strides = array<i32>} : memref<8x512xf32, #tpu.memory_space<vmem>>, vector<8x512xf32>,
    %cst_6 = arith.constant 1.000000e+00 : f32
    %9 = vector.broadcast %cst_6 : f32 to vector<8x512xf32>
    %10 = arith.divf %9, %7 : vector<8x512xf32>
    %c0_7 = arith.constant 0 : index
    %c0_8 = arith.constant 0 : index
    %11 = vector.load %arg4[%c0_7, %c0_8] : memref<8x512xf32, #tpu.memory_space<vmem>>, vector<8x512xf32>
    tpu.vector_store %arg4[%c0_7, %c0_8], %10 {strides = array<i32>} : memref<8x512xf32, #tpu.memory_space<vmem>>, vector<8x512xf32>,
    return
  }
  func.func @transform_0(%arg0: i32) -> (i32, i32, i32) {
    %c0_i32 = arith.constant 0 : i32
    %c0_i32_0 = arith.constant 0 : i32
    %c0_i32_1 = arith.constant 0 : i32
    %c0_i32_2 = arith.constant 0 : i32
    return %c0_i32, %c0_i32_0, %c0_i32_1 : i32, i32, i32
  }
  func.func @transform_1(%arg0: i32) -> (i32, i32) {
    %c0_i32 = arith.constant 0 : i32
    %c0_i32_0 = arith.constant 0 : i32
    return %c0_i32, %arg0 : i32, i32
  }
  func.func @transform_2(%arg0: i32) -> (i32, i32) {
    %c0_i32 = arith.constant 0 : i32
    %c0_i32_0 = arith.constant 0 : i32
    return %c0_i32, %arg0 : i32, i32
  }
  func.func @transform_3(%arg0: i32) -> (i32, i32) {
    %c0_i32 = arith.constant 0 : i32
    %c0_i32_0 = arith.constant 0 : i32
    return %c0_i32, %arg0 : i32, i32
  }
}

</mosaic_0001>

<llo_original>
// kernel: tpu_custom_call.1
$region0: #{tpu_custom_call.1}
  #allocation0 [shape = 'u32[]', space=smem, size = 0x4, offset = 0x4, fixed_abs, tag = 'smem constant byte address 0x4 - core index']
  #allocation1 [shape = 'u32[144,128]{1,0:T(1,128)}', space=vmem, size = 0x12000, scoped, tag = 'internal scratch']
  %s0 = inlined_call_operand.vmem [shape: f32[8,32,1], index: 0, kind: input, shape index: {}]
  %s1 = inlined_call_operand.vmem [shape: f32[32,1024], index: 1, kind: input, shape index: {}]
  %s2 = inlined_call_operand.hbm [shape: f32[8,1024], index: 2, kind: output, shape index: {0}]
  %s3 = inlined_call_operand.hbm [shape: f32[8,1024], index: 3, kind: output, shape index: {1}]
  %4 = xla_tuple %s2, %s3
  %s5 = sld [smem:[#allocation0]]
  $region72: #{tpu_custom_call.1} parent=0
    _
  %s7 = ssub.s32 1, %s5
  %s8 = scalar_select 0, %s7, %s5
  $region1: #{tpu_custom_call.1} parent=0
    #allocation2 [shape = 'u8[131072]{0}', space=vmem, size = 0x20000, scoped, tag = 'input window, operand 1']
    #allocation3 [shape = 'u8[32768]{0}', space=vmem, size = 0x8000, scoped, tag = 'output window, operand 0']
    #allocation4 [shape = 's32[2]{0}', space=sflag, size = 0x8, scoped, tag = 'scoped memory for tpu_custom_call.1']
    #allocation5 [shape = 'u8[32768]{0}', space=vmem, size = 0x8000, scoped, tag = 'output window, operand 1']
    #allocation6 [shape = 's32[2]{0}', space=sflag, size = 0x8, scoped, tag = 'scoped memory for tpu_custom_call.1']
    %9 = vsyncpa [#allocation4], 0
    %s10 = scalar_lea.sflag [#allocation4], 1
    %11 = vsyncpa %s10, 0
    %12 = vsyncpa [#allocation6], 0
    %s13 = scalar_lea.sflag [#allocation6], 1
    %14 = vsyncpa %s13, 0
    loop: start=0, step=1, limit=4
    $region2: #{tpu_custom_call.1} parent=1 // loop_pre_header
      _
    $region3: #{tpu_custom_call.1} parent=1 // loop_header
      %s16 = sphi 0, %s20
      %p17 = scmp.ge.s32.totalorder %s16, 4
      %s24 = sphi 0, %s24
      %s26 = sphi 0, %s24
      %s27 = sphi 0, %s26
      %s41 = sphi 0, %s27
      %s47 = sphi 0, %s49
      %s50 = sphi 0, %s47
      %s51 = sphi 0, %s50
      %s67 = sphi 0, %s51
      %s73 = sphi 0, %s75
      %s76 = sphi 0, %s73
      %s77 = sphi 0, %s76
      %s93 = sphi 0, %s77
      %s99 = sphi 0, %s101
      %s102 = sphi 0, %s99
      %s103 = sphi 0, %s102
      %s119 = sphi 0, %s103
    $region4: #{tpu_custom_call.1} parent=1 // loop_header_branch
      %19 = sbr.rel (%p17) target = $region8
    $region5: #{tpu_custom_call.1} parent=1 // loop_body
      %s21 = ssub.s32 %s16, 1
      %s22 = ssub.s32 %s16, 2
      %s23 = sadd.s32 %s16, 1
      %s25 = sadd.s32 %s24, 1
      %p28 = scmp.eq.s32.totalorder %s16, 1
      %p29 = scmp.ne.s32.totalorder %s24, %s26
      %p30 = scmp.eq.s32.totalorder %s16, 0
      %p31 = por %p29, %p30
      %p32 = scmp.ne.s32.totalorder %s24, %s26
      %p33 = scmp.eq.s32.totalorder %s21, 1
      %p34 = por %p32, %p33
      %p35 = scmp.ne.s32.totalorder %s26, %s27
      %p36 = scmp.eq.s32.totalorder %s21, 0
      %p37 = por %p35, %p36
      %p38 = scmp.ne.s32.totalorder %s26, %s27
      %p39 = scmp.eq.s32.totalorder %s22, 1
      %p40 = por %p38, %p39
      %p42 = scmp.ne.s32.totalorder %s27, %s41
      %p43 = scmp.eq.s32.totalorder %s22, 0
      %p44 = por %p42, %p43
      %s45 = ssub.s32 %s16, %s23
      %p46 = scmp.eq.s32.totalorder %s45, 0
      %s48 = sadd.s32 %s47, 1
      %s49 = scalar_select %p46, %s47, %s48
      %p52 = pneg %p46
      %p53 = scmp.eq.s32.totalorder %s16, 1
      %p54 = por %p52, %p53
      %p55 = scmp.ne.s32.totalorder %s47, %s50
      %p56 = scmp.eq.s32.totalorder %s16, 0
      %p57 = por %p55, %p56
      %p58 = scmp.ne.s32.totalorder %s47, %s50
      %p59 = scmp.eq.s32.totalorder %s21, 1
      %p60 = por %p58, %p59
      %p61 = scmp.ne.s32.totalorder %s50, %s51
      %p62 = scmp.eq.s32.totalorder %s21, 0
      %p63 = por %p61, %p62
      %p64 = scmp.ne.s32.totalorder %s50, %s51
      %p65 = scmp.eq.s32.totalorder %s22, 1
      %p66 = por %p64, %p65
      %p68 = scmp.ne.s32.totalorder %s51, %s67
      %p69 = scmp.eq.s32.totalorder %s22, 0
      %p70 = por %p68, %p69
      %s71 = ssub.s32 %s16, %s23
      %p72 = scmp.eq.s32.totalorder %s71, 0
      %s74 = sadd.s32 %s73, 1
      %s75 = scalar_select %p72, %s73, %s74
      %p78 = pneg %p72
      %p79 = scmp.eq.s32.totalorder %s16, 1
      %p80 = por %p78, %p79
      %p81 = scmp.ne.s32.totalorder %s73, %s76
      %p82 = scmp.eq.s32.totalorder %s16, 0
      %p83 = por %p81, %p82
      %p84 = scmp.ne.s32.totalorder %s73, %s76
      %p85 = scmp.eq.s32.totalorder %s21, 1
      %p86 = por %p84, %p85
      %p87 = scmp.ne.s32.totalorder %s76, %s77
      %p88 = scmp.eq.s32.totalorder %s21, 0
      %p89 = por %p87, %p88
      %p90 = scmp.ne.s32.totalorder %s76, %s77
      %p91 = scmp.eq.s32.totalorder %s22, 1
      %p92 = por %p90, %p91
      %p94 = scmp.ne.s32.totalorder %s77, %s93
      %p95 = scmp.eq.s32.totalorder %s22, 0
      %p96 = por %p94, %p95
      %s97 = ssub.s32 %s16, %s23
      %p98 = scmp.eq.s32.totalorder %s97, 0
      %s100 = sadd.s32 %s99, 1
      %s101 = scalar_select %p98, %s99, %s100
      %p104 = pneg %p98
      %p105 = scmp.eq.s32.totalorder %s16, 1
      %p106 = por %p104, %p105
      %p107 = scmp.ne.s32.totalorder %s99, %s102
      %p108 = scmp.eq.s32.totalorder %s16, 0
      %p109 = por %p107, %p108
      %p110 = scmp.ne.s32.totalorder %s99, %s102
      %p111 = scmp.eq.s32.totalorder %s21, 1
      %p112 = por %p110, %p111
      %p113 = scmp.ne.s32.totalorder %s102, %s103
      %p114 = scmp.eq.s32.totalorder %s21, 0
      %p115 = por %p113, %p114
      %p116 = scmp.ne.s32.totalorder %s102, %s103
      %p117 = scmp.eq.s32.totalorder %s22, 1
      %p118 = por %p116, %p117
      %p120 = scmp.ne.s32.totalorder %s103, %s119
      %p121 = scmp.eq.s32.totalorder %s22, 0
      %p122 = por %p120, %p121
      %p123 = scmp.le.s32.totalorder 1, %s16
      %p124 = scmp.lt.s32.totalorder %s16, 3
      %p125 = pnand %p123, %p124
      %p126 = pneg %p125
      // Predicated region
      $region9: #{tpu_custom_call.1} parent=5 // pred_check
        _
      $region10: #{tpu_custom_call.1} parent=5 // pred_check_branch
        %128 = sbr.rel (%p125) target = $region12
      $region11: #{tpu_custom_call.1} parent=5 // pred_region
        %s129 = ssub.s32 %s16, 1
        // Predicated region
        $region13: #{tpu_custom_call.1} parent=11 // pred_check
          %p130 = pneg %p37
        $region14: #{tpu_custom_call.1} parent=11 // pred_check_branch
          %132 = sbr.rel (%p130) target = $region16
        $region15: #{tpu_custom_call.1} parent=11 // pred_region
          _
        $region16: #{tpu_custom_call.1} parent=11 // pred_fallthru
          _
      $region12: #{tpu_custom_call.1} parent=5 // pred_fallthru
        _
      %p133 = scmp.lt.s32.totalorder %s16, 2
      // Predicated region
      $region17: #{tpu_custom_call.1} parent=5 // pred_check
        %p134 = pneg %p133
      $region18: #{tpu_custom_call.1} parent=5 // pred_check_branch
        %136 = sbr.rel (%p134) target = $region20
      $region19: #{tpu_custom_call.1} parent=5 // pred_region
        // Predicated region
        $region21: #{tpu_custom_call.1} parent=19 // pred_check
          %p137 = pneg %p57
        $region22: #{tpu_custom_call.1} parent=19 // pred_check_branch
          %139 = sbr.rel (%p137) target = $region24
        $region23: #{tpu_custom_call.1} parent=19 // pred_region
          %s140 = sand.u32 %s47, 1
          %s141 = sand.u32 %s47, 1
          %s142 = smul.addr %s141, 128
          %s143 = scalar_lea.vmem [#allocation2], %s142
          %s144 = smul.u32 4, %s16
          %s145 = smul.addr %s144, 8
          %s146 = scalar_lea.vmem %s1, %s145
          // Predicated region
          $region25: #{tpu_custom_call.1} parent=23 // pred_check
            _
          $region26: #{tpu_custom_call.1} parent=23 // pred_check_branch
            %148 = sbr.rel (0) target = $region28
          $region27: #{tpu_custom_call.1} parent=23 // pred_region
            // Predicated region
            $region29: #{tpu_custom_call.1} parent=27 // pred_check
              _
            $region30: #{tpu_custom_call.1} parent=27 // pred_check_branch
              %150 = sbr.rel (0) target = $region32
            $region31: #{tpu_custom_call.1} parent=27 // pred_region
              loop: start=0, step=1, limit=1
              $region33: #{tpu_custom_call.1} parent=31 // loop_pre_header
                _
              $region34: #{tpu_custom_call.1} parent=31 // loop_header
                %s152 = sphi 0, %s156
                %p153 = scmp.ge.s32.totalorder %s152, 1
                %s157 = sphi %s146, %s146
                %s158 = sphi %s143, %s143
              $region35: #{tpu_custom_call.1} parent=31 // loop_header_branch
                %155 = sbr.rel (%p153) target = $region39
              $region36: #{tpu_custom_call.1} parent=31 // loop_body
                %v159 = vld [vmem:[%s157] sm:$0xff]
                %160 = vst [vmem:[%s158] sm:$0xff] %v159
                %v161 = vld [vmem:[%s157 + $0x8] sm:$0xff]
                %162 = vst [vmem:[%s158 + $0x8] sm:$0xff] %v161
                %v163 = vld [vmem:[%s157 + $0x10] sm:$0xff]
                %164 = vst [vmem:[%s158 + $0x10] sm:$0xff] %v163
                %v165 = vld [vmem:[%s157 + $0x18] sm:$0xff]
                %166 = vst [vmem:[%s158 + $0x18] sm:$0xff] %v165
                %v167 = vld [vmem:[%s157 + $0x40] sm:$0xff]
                %168 = vst [vmem:[%s158 + $0x20] sm:$0xff] %v167
                %v169 = vld [vmem:[%s157 + $0x48] sm:$0xff]
                %170 = vst [vmem:[%s158 + $0x28] sm:$0xff] %v169
                %v171 = vld [vmem:[%s157 + $0x50] sm:$0xff]
                %172 = vst [vmem:[%s158 + $0x30] sm:$0xff] %v171
                %v173 = vld [vmem:[%s157 + $0x58] sm:$0xff]
                %174 = vst [vmem:[%s158 + $0x38] sm:$0xff] %v173
                %v175 = vld [vmem:[%s157 + $0x80] sm:$0xff]
                %176 = vst [vmem:[%s158 + $0x40] sm:$0xff] %v175
                %v177 = vld [vmem:[%s157 + $0x88] sm:$0xff]
                %178 = vst [vmem:[%s158 + $0x48] sm:$0xff] %v177
                %v179 = vld [vmem:[%s157 + $0x90] sm:$0xff]
                %180 = vst [vmem:[%s158 + $0x50] sm:$0xff] %v179
                %v181 = vld [vmem:[%s157 + $0x98] sm:$0xff]
                %182 = vst [vmem:[%s158 + $0x58] sm:$0xff] %v181
                %v183 = vld [vmem:[%s157 + $0xc0] sm:$0xff]
                %184 = vst [vmem:[%s158 + $0x60] sm:$0xff] %v183
                %v185 = vld [vmem:[%s157 + $0xc8] sm:$0xff]
                %186 = vst [vmem:[%s158 + $0x68] sm:$0xff] %v185
                %v187 = vld [vmem:[%s157 + $0xd0] sm:$0xff]
                %188 = vst [vmem:[%s158 + $0x70] sm:$0xff] %v187
                %v189 = vld [vmem:[%s157 + $0xd8] sm:$0xff]
                %190 = vst [vmem:[%s158 + $0x78] sm:$0xff] %v189
              $region37: #{tpu_custom_call.1} parent=31 // loop_footer
                %s156 = sadd.s32 1, %s152
              $region38: #{tpu_custom_call.1} parent=31 // loop_footer_branch
                %151 = sbr.rel target = $region34
              $region39: #{tpu_custom_call.1} parent=31 // loop_exit
                _
            $region32: #{tpu_custom_call.1} parent=27 // pred_fallthru
              _
            // Predicated region
            $region40: #{tpu_custom_call.1} parent=27 // pred_check
              _
            $region41: #{tpu_custom_call.1} parent=27 // pred_check_branch
              %192 = sbr.rel target = $region43
            $region42: #{tpu_custom_call.1} parent=27 // pred_region
              _
            $region43: #{tpu_custom_call.1} parent=27 // pred_fallthru
              _
          $region28: #{tpu_custom_call.1} parent=23 // pred_fallthru
            _
          %193 = vnop
        $region24: #{tpu_custom_call.1} parent=19 // pred_fallthru
          _
      $region20: #{tpu_custom_call.1} parent=5 // pred_fallthru
        _
      %p194 = scmp.le.s32.totalorder 1, %s16
      %p195 = scmp.lt.s32.totalorder %s16, 3
      %p196 = pnand %p194, %p195
      %p197 = pneg %p196
      // Predicated region
      $region44: #{tpu_custom_call.1} parent=5 // pred_check
        _
      $region45: #{tpu_custom_call.1} parent=5 // pred_check_branch
        %199 = sbr.rel (%p196) target = $region47
      $region46: #{tpu_custom_call.1} parent=5 // pred_region
        %s200 = ssub.s32 %s16, 1
        %s201 = sand.u32 %s50, 1
        %s202 = sand.u32 %s50, 1
        %s203 = smul.addr %s202, 128
        %s204 = scalar_lea.vmem [#allocation2], %s203
        // Predicated region
        $region48: #{tpu_custom_call.1} parent=46 // pred_check
          %p205 = pneg %p63
        $region49: #{tpu_custom_call.1} parent=46 // pred_check_branch
          %207 = sbr.rel (%p205) target = $region51
        $region50: #{tpu_custom_call.1} parent=46 // pred_region
          _
        $region51: #{tpu_custom_call.1} parent=46 // pred_fallthru
          _
        %p208 = pneg %p37
        %p209 = pneg %p34
        %s210 = sand.u32 %s50, 1
        %s211 = sand.u32 %s50, 1
        %s212 = smul.addr %s211, 128
        %s213 = scalar_lea.vmem [#allocation2], %s212
        %p214 = pneg %p63
        %p215 = pneg %p60
        %p216 = pneg %p89
        %p217 = pneg %p86
        %s218 = sand.u32 %s76, 1
        %s219 = scalar_lea.sflag [#allocation4], %s218
        %s220 = sand.u32 %s76, 1
        %s221 = smul.addr %s220, 32
        %s222 = scalar_lea.vmem [#allocation3], %s221
        %p223 = pneg %p115
        %p224 = pneg %p112
        %s225 = sand.u32 %s102, 1
        %s226 = scalar_lea.sflag [#allocation6], %s225
        %s227 = sand.u32 %s102, 1
        %s228 = smul.addr %s227, 32
        %s229 = scalar_lea.vmem [#allocation5], %s228
        %s230 = smul.u32 4, %s21
        %s231 = smul.u32 4, %s21
        %s232 = smul.u32 4, %s21
        %v233 = vld [vmem:[%s0] sm:$0xff]
        %v234 = vld [vmem:[%s0 + $0x8] sm:$0xff]
        %v235 = vld [vmem:[%s0 + $0x10] sm:$0xff]
        %v236 = vld [vmem:[%s0 + $0x18] sm:$0xff]
        %v237 = vld [vmem:[%s0 + $0x20] sm:$0xff]
        %v238 = vld [vmem:[%s0 + $0x28] sm:$0xff]
        %v239 = vld [vmem:[%s0 + $0x30] sm:$0xff]
        %v240 = vld [vmem:[%s0 + $0x38] sm:$0xff]
        %v241 = vld [vmem:[%s0 + $0x40] sm:$0xff]
        %v242 = vld [vmem:[%s0 + $0x48] sm:$0xff]
        %v243 = vld [vmem:[%s0 + $0x50] sm:$0xff]
        %v244 = vld [vmem:[%s0 + $0x58] sm:$0xff]
        %v245 = vld [vmem:[%s0 + $0x60] sm:$0xff]
        %v246 = vld [vmem:[%s0 + $0x68] sm:$0xff]
        %v247 = vld [vmem:[%s0 + $0x70] sm:$0xff]
        %v248 = vld [vmem:[%s0 + $0x78] sm:$0xff]
        %v249 = vld [vmem:[%s0 + $0x80] sm:$0xff]
        %v250 = vld [vmem:[%s0 + $0x88] sm:$0xff]
        %v251 = vld [vmem:[%s0 + $0x90] sm:$0xff]
        %v252 = vld [vmem:[%s0 + $0x98] sm:$0xff]
        %v253 = vld [vmem:[%s0 + $0xa0] sm:$0xff]
        %v254 = vld [vmem:[%s0 + $0xa8] sm:$0xff]
        %v255 = vld [vmem:[%s0 + $0xb0] sm:$0xff]
        %v256 = vld [vmem:[%s0 + $0xb8] sm:$0xff]
        %v257 = vld [vmem:[%s0 + $0xc0] sm:$0xff]
        %v258 = vld [vmem:[%s0 + $0xc8] sm:$0xff]
        %v259 = vld [vmem:[%s0 + $0xd0] sm:$0xff]
        %v260 = vld [vmem:[%s0 + $0xd8] sm:$0xff]
        %v261 = vld [vmem:[%s0 + $0xe0] sm:$0xff]
        %v262 = vld [vmem:[%s0 + $0xe8] sm:$0xff]
        %v263 = vld [vmem:[%s0 + $0xf0] sm:$0xff]
        %v264 = vld [vmem:[%s0 + $0xf8] sm:$0xff]
        %v265 = vld [vmem:[%s204] sm:$0xff]
        %v266 = vld [vmem:[%s204 + $0x8] sm:$0xff]
        %v267 = vld [vmem:[%s204 + $0x10] sm:$0xff]
        %v268 = vld [vmem:[%s204 + $0x18] sm:$0xff]
        %v269 = vld [vmem:[%s204 + $0x20] sm:$0xff]
        %v270 = vld [vmem:[%s204 + $0x28] sm:$0xff]
        %v271 = vld [vmem:[%s204 + $0x30] sm:$0xff]
        %v272 = vld [vmem:[%s204 + $0x38] sm:$0xff]
        %v273 = vld [vmem:[%s204 + $0x40] sm:$0xff]
        %v274 = vld [vmem:[%s204 + $0x48] sm:$0xff]
        %v275 = vld [vmem:[%s204 + $0x50] sm:$0xff]
        %v276 = vld [vmem:[%s204 + $0x58] sm:$0xff]
        %v277 = vld [vmem:[%s204 + $0x60] sm:$0xff]
        %v278 = vld [vmem:[%s204 + $0x68] sm:$0xff]
        %v279 = vld [vmem:[%s204 + $0x70] sm:$0xff]
        %v280 = vld [vmem:[%s204 + $0x78] sm:$0xff]
        %282 = vset.pattern.permute.xlu0 0
        %283 = vperm.xlu0 %282, %v233
        %v284 = vpop.permute.xlu0 %283
        %287 = vset.pattern.permute.xlu0 0
        %288 = vperm.xlu0 %287, %v234
        %v289 = vpop.permute.xlu0 %288
        %292 = vset.pattern.permute.xlu0 0
        %293 = vperm.xlu0 %292, %v235
        %v294 = vpop.permute.xlu0 %293
        %297 = vset.pattern.permute.xlu0 0
        %298 = vperm.xlu0 %297, %v236
        %v299 = vpop.permute.xlu0 %298
        %302 = vset.pattern.permute.xlu0 0
        %303 = vperm.xlu0 %302, %v237
        %v304 = vpop.permute.xlu0 %303
        %307 = vset.pattern.permute.xlu0 0
        %308 = vperm.xlu0 %307, %v238
        %v309 = vpop.permute.xlu0 %308
        %312 = vset.pattern.permute.xlu0 0
        %313 = vperm.xlu0 %312, %v239
        %v314 = vpop.permute.xlu0 %313
        %317 = vset.pattern.permute.xlu0 0
        %318 = vperm.xlu0 %317, %v240
        %v319 = vpop.permute.xlu0 %318
        %322 = vset.pattern.permute.xlu0 0
        %323 = vperm.xlu0 %322, %v241
        %v324 = vpop.permute.xlu0 %323
        %327 = vset.pattern.permute.xlu0 0
        %328 = vperm.xlu0 %327, %v242
        %v329 = vpop.permute.xlu0 %328
        %332 = vset.pattern.permute.xlu0 0
        %333 = vperm.xlu0 %332, %v243
        %v334 = vpop.permute.xlu0 %333
        %337 = vset.pattern.permute.xlu0 0
        %338 = vperm.xlu0 %337, %v244
        %v339 = vpop.permute.xlu0 %338
        %342 = vset.pattern.permute.xlu0 0
        %343 = vperm.xlu0 %342, %v245
        %v344 = vpop.permute.xlu0 %343
        %347 = vset.pattern.permute.xlu0 0
        %348 = vperm.xlu0 %347, %v246
        %v349 = vpop.permute.xlu0 %348
        %352 = vset.pattern.permute.xlu0 0
        %353 = vperm.xlu0 %352, %v247
        %v354 = vpop.permute.xlu0 %353
        %357 = vset.pattern.permute.xlu0 0
        %358 = vperm.xlu0 %357, %v248
        %v359 = vpop.permute.xlu0 %358
        %362 = vset.pattern.permute.xlu0 0
        %363 = vperm.xlu0 %362, %v249
        %v364 = vpop.permute.xlu0 %363
        %367 = vset.pattern.permute.xlu0 0
        %368 = vperm.xlu0 %367, %v250
        %v369 = vpop.permute.xlu0 %368
        %372 = vset.pattern.permute.xlu0 0
        %373 = vperm.xlu0 %372, %v251
        %v374 = vpop.permute.xlu0 %373
        %377 = vset.pattern.permute.xlu0 0
        %378 = vperm.xlu0 %377, %v252
        %v379 = vpop.permute.xlu0 %378
        %382 = vset.pattern.permute.xlu0 0
        %383 = vperm.xlu0 %382, %v253
        %v384 = vpop.permute.xlu0 %383
        %387 = vset.pattern.permute.xlu0 0
        %388 = vperm.xlu0 %387, %v254
        %v389 = vpop.permute.xlu0 %388
        %392 = vset.pattern.permute.xlu0 0
        %393 = vperm.xlu0 %392, %v255
        %v394 = vpop.permute.xlu0 %393
        %397 = vset.pattern.permute.xlu0 0
        %398 = vperm.xlu0 %397, %v256
        %v399 = vpop.permute.xlu0 %398
        %402 = vset.pattern.permute.xlu0 0
        %403 = vperm.xlu0 %402, %v257
        %v404 = vpop.permute.xlu0 %403
        %407 = vset.pattern.permute.xlu0 0
        %408 = vperm.xlu0 %407, %v258
        %v409 = vpop.permute.xlu0 %408
        %412 = vset.pattern.permute.xlu0 0
        %413 = vperm.xlu0 %412, %v259
        %v414 = vpop.permute.xlu0 %413
        %417 = vset.pattern.permute.xlu0 0
        %418 = vperm.xlu0 %417, %v260
        %v419 = vpop.permute.xlu0 %418
        %422 = vset.pattern.permute.xlu0 0
        %423 = vperm.xlu0 %422, %v261
        %v424 = vpop.permute.xlu0 %423
        %427 = vset.pattern.permute.xlu0 0
        %428 = vperm.xlu0 %427, %v262
        %v429 = vpop.permute.xlu0 %428
        %432 = vset.pattern.permute.xlu0 0
        %433 = vperm.xlu0 %432, %v263
        %v434 = vpop.permute.xlu0 %433
        %437 = vset.pattern.permute.xlu0 0
        %438 = vperm.xlu0 %437, %v264
        %v439 = vpop.permute.xlu0 %438
        %v441 = vsub.f32 %v284, %v265
        %v442 = vsub.f32 %v284, %v266
        %v443 = vsub.f32 %v284, %v267
        %v444 = vsub.f32 %v284, %v268
        %v445 = vsub.f32 %v289, %v269
        %v446 = vsub.f32 %v289, %v270
        %v447 = vsub.f32 %v289, %v271
        %v448 = vsub.f32 %v289, %v272
        %v449 = vsub.f32 %v294, %v273
        %v450 = vsub.f32 %v294, %v274
        %v451 = vsub.f32 %v294, %v275
        %v452 = vsub.f32 %v294, %v276
        %v453 = vsub.f32 %v299, %v277
        %v454 = vsub.f32 %v299, %v278
        %v455 = vsub.f32 %v299, %v279
        %v456 = vsub.f32 %v299, %v280
        %v457 = vsub.f32 %v304, %v265
        %v458 = vsub.f32 %v304, %v266
        %v459 = vsub.f32 %v304, %v267
        %v460 = vsub.f32 %v304, %v268
        %v461 = vsub.f32 %v309, %v269
        %v462 = vsub.f32 %v309, %v270
        %v463 = vsub.f32 %v309, %v271
        %v464 = vsub.f32 %v309, %v272
        %v465 = vsub.f32 %v314, %v273
        %v466 = vsub.f32 %v314, %v274
        %v467 = vsub.f32 %v314, %v275
        %v468 = vsub.f32 %v314, %v276
        %v469 = vsub.f32 %v319, %v277
        %v470 = vsub.f32 %v319, %v278
        %v471 = vsub.f32 %v319, %v279
        %v472 = vsub.f32 %v319, %v280
        %v473 = vsub.f32 %v324, %v265
        %v474 = vsub.f32 %v324, %v266
        %v475 = vsub.f32 %v324, %v267
        %v476 = vsub.f32 %v324, %v268
        %v477 = vsub.f32 %v329, %v269
        %v478 = vsub.f32 %v329, %v270
        %v479 = vsub.f32 %v329, %v271
        %v480 = vsub.f32 %v329, %v272
        %v481 = vsub.f32 %v334, %v273
        %v482 = vsub.f32 %v334, %v274
        %v483 = vsub.f32 %v334, %v275
        %v484 = vsub.f32 %v334, %v276
        %v485 = vsub.f32 %v339, %v277
        %v486 = vsub.f32 %v339, %v278
        %v487 = vsub.f32 %v339, %v279
        %v488 = vsub.f32 %v339, %v280
        %v489 = vsub.f32 %v344, %v265
        %v490 = vsub.f32 %v344, %v266
        %v491 = vsub.f32 %v344, %v267
        %v492 = vsub.f32 %v344, %v268
        %v493 = vsub.f32 %v349, %v269
        %v494 = vsub.f32 %v349, %v270
        %v495 = vsub.f32 %v349, %v271
        %v496 = vsub.f32 %v349, %v272
        %v497 = vsub.f32 %v354, %v273
        %v498 = vsub.f32 %v354, %v274
        %v499 = vsub.f32 %v354, %v275
        %v500 = vsub.f32 %v354, %v276
        %v501 = vsub.f32 %v359, %v277
        %v502 = vsub.f32 %v359, %v278
        %v503 = vsub.f32 %v359, %v279
        %v504 = vsub.f32 %v359, %v280
        %v505 = vsub.f32 %v364, %v265
        %v506 = vsub.f32 %v364, %v266
        %v507 = vsub.f32 %v364, %v267
        %v508 = vsub.f32 %v364, %v268
        %v509 = vsub.f32 %v369, %v269
        %v510 = vsub.f32 %v369, %v270
        %v511 = vsub.f32 %v369, %v271
        %v512 = vsub.f32 %v369, %v272
        %v513 = vsub.f32 %v374, %v273
        %v514 = vsub.f32 %v374, %v274
        %v515 = vsub.f32 %v374, %v275
        %v516 = vsub.f32 %v374, %v276
        %v517 = vsub.f32 %v379, %v277
        %v518 = vsub.f32 %v379, %v278
        %v519 = vsub.f32 %v379, %v279
        %v520 = vsub.f32 %v379, %v280
        %v521 = vsub.f32 %v384, %v265
        %v522 = vsub.f32 %v384, %v266
        %v523 = vsub.f32 %v384, %v267
        %v524 = vsub.f32 %v384, %v268
        %v525 = vsub.f32 %v389, %v269
        %v526 = vsub.f32 %v389, %v270
        %v527 = vsub.f32 %v389, %v271
        %v528 = vsub.f32 %v389, %v272
        %v529 = vsub.f32 %v394, %v273
        %v530 = vsub.f32 %v394, %v274
        %v531 = vsub.f32 %v394, %v275
        %v532 = vsub.f32 %v394, %v276
        %v533 = vsub.f32 %v399, %v277
        %v534 = vsub.f32 %v399, %v278
        %v535 = vsub.f32 %v399, %v279
        %v536 = vsub.f32 %v399, %v280
        %v537 = vsub.f32 %v404, %v265
        %v538 = vsub.f32 %v404, %v266
        %v539 = vsub.f32 %v404, %v267
        %v540 = vsub.f32 %v404, %v268
        %v541 = vsub.f32 %v409, %v269
        %v542 = vsub.f32 %v409, %v270
        %v543 = vsub.f32 %v409, %v271
        %v544 = vsub.f32 %v409, %v272
        %v545 = vsub.f32 %v414, %v273
        %v546 = vsub.f32 %v414, %v274
        %v547 = vsub.f32 %v414, %v275
        %v548 = vsub.f32 %v414, %v276
        %v549 = vsub.f32 %v419, %v277
        %v550 = vsub.f32 %v419, %v278
        %v551 = vsub.f32 %v419, %v279
        %v552 = vsub.f32 %v419, %v280
        %v553 = vsub.f32 %v424, %v265
        %v554 = vsub.f32 %v424, %v266
        %v555 = vsub.f32 %v424, %v267
        %v556 = vsub.f32 %v424, %v268
        %v557 = vsub.f32 %v429, %v269
        %v558 = vsub.f32 %v429, %v270
        %v559 = vsub.f32 %v429, %v271
        %v560 = vsub.f32 %v429, %v272
        %v561 = vsub.f32 %v434, %v273
        %v562 = vsub.f32 %v434, %v274
        %v563 = vsub.f32 %v434, %v275
        %v564 = vsub.f32 %v434, %v276
        %v565 = vsub.f32 %v439, %v277
        %v566 = vsub.f32 %v439, %v278
        %v567 = vsub.f32 %v439, %v279
        %v568 = vsub.f32 %v439, %v280
        %v569 = vand.u32 2147483647, %v441
        %v570 = vand.u32 2147483647, %v442
        %v571 = vand.u32 2147483647, %v443
        %v572 = vand.u32 2147483647, %v444
        %v573 = vand.u32 2147483647, %v445
        %v574 = vand.u32 2147483647, %v446
        %v575 = vand.u32 2147483647, %v447
        %v576 = vand.u32 2147483647, %v448
        %v577 = vand.u32 2147483647, %v449
        %v578 = vand.u32 2147483647, %v450
        %v579 = vand.u32 2147483647, %v451
        %v580 = vand.u32 2147483647, %v452
        %v581 = vand.u32 2147483647, %v453
        %v582 = vand.u32 2147483647, %v454
        %v583 = vand.u32 2147483647, %v455
        %v584 = vand.u32 2147483647, %v456
        %v585 = vand.u32 2147483647, %v457
        %v586 = vand.u32 2147483647, %v458
        %v587 = vand.u32 2147483647, %v459
        %v588 = vand.u32 2147483647, %v460
        %v589 = vand.u32 2147483647, %v461
        %v590 = vand.u32 2147483647, %v462
        %v591 = vand.u32 2147483647, %v463
        %v592 = vand.u32 2147483647, %v464
        %v593 = vand.u32 2147483647, %v465
        %v594 = vand.u32 2147483647, %v466
        %v595 = vand.u32 2147483647, %v467
        %v596 = vand.u32 2147483647, %v468
        %v597 = vand.u32 2147483647, %v469
        %v598 = vand.u32 2147483647, %v470
        %v599 = vand.u32 2147483647, %v471
        %v600 = vand.u32 2147483647, %v472
        %v601 = vand.u32 2147483647, %v473
        %v602 = vand.u32 2147483647, %v474
        %v603 = vand.u32 2147483647, %v475
        %v604 = vand.u32 2147483647, %v476
        %v605 = vand.u32 2147483647, %v477
        %v606 = vand.u32 2147483647, %v478
        %v607 = vand.u32 2147483647, %v479
        %v608 = vand.u32 2147483647, %v480
        %v609 = vand.u32 2147483647, %v481
        %v610 = vand.u32 2147483647, %v482
        %v611 = vand.u32 2147483647, %v483
        %v612 = vand.u32 2147483647, %v484
        %v613 = vand.u32 2147483647, %v485
        %v614 = vand.u32 2147483647, %v486
        %v615 = vand.u32 2147483647, %v487
        %v616 = vand.u32 2147483647, %v488
        %v617 = vand.u32 2147483647, %v489
        %v618 = vand.u32 2147483647, %v490
        %v619 = vand.u32 2147483647, %v491
        %v620 = vand.u32 2147483647, %v492
        %v621 = vand.u32 2147483647, %v493
        %v622 = vand.u32 2147483647, %v494
        %v623 = vand.u32 2147483647, %v495
        %v624 = vand.u32 2147483647, %v496
        %v625 = vand.u32 2147483647, %v497
        %v626 = vand.u32 2147483647, %v498
        %v627 = vand.u32 2147483647, %v499
        %v628 = vand.u32 2147483647, %v500
        %v629 = vand.u32 2147483647, %v501
        %v630 = vand.u32 2147483647, %v502
        %v631 = vand.u32 2147483647, %v503
        %v632 = vand.u32 2147483647, %v504
        %v633 = vand.u32 2147483647, %v505
        %v634 = vand.u32 2147483647, %v506
        %v635 = vand.u32 2147483647, %v507
        %v636 = vand.u32 2147483647, %v508
        %v637 = vand.u32 2147483647, %v509
        %v638 = vand.u32 2147483647, %v510
        %v639 = vand.u32 2147483647, %v511
        %v640 = vand.u32 2147483647, %v512
        %v641 = vand.u32 2147483647, %v513
        %v642 = vand.u32 2147483647, %v514
        %v643 = vand.u32 2147483647, %v515
        %v644 = vand.u32 2147483647, %v516
        %v645 = vand.u32 2147483647, %v517
        %v646 = vand.u32 2147483647, %v518
        %v647 = vand.u32 2147483647, %v519
        %v648 = vand.u32 2147483647, %v520
        %v649 = vand.u32 2147483647, %v521
        %v650 = vand.u32 2147483647, %v522
        %v651 = vand.u32 2147483647, %v523
        %v652 = vand.u32 2147483647, %v524
        %v653 = vand.u32 2147483647, %v525
        %v654 = vand.u32 2147483647, %v526
        %v655 = vand.u32 2147483647, %v527
        %v656 = vand.u32 2147483647, %v528
        %v657 = vand.u32 2147483647, %v529
        %v658 = vand.u32 2147483647, %v530
        %v659 = vand.u32 2147483647, %v531
        %v660 = vand.u32 2147483647, %v532
        %v661 = vand.u32 2147483647, %v533
        %v662 = vand.u32 2147483647, %v534
        %v663 = vand.u32 2147483647, %v535
        %v664 = vand.u32 2147483647, %v536
        %v665 = vand.u32 2147483647, %v537
        %v666 = vand.u32 2147483647, %v538
        %v667 = vand.u32 2147483647, %v539
        %v668 = vand.u32 2147483647, %v540
        %v669 = vand.u32 2147483647, %v541
        %v670 = vand.u32 2147483647, %v542
        %v671 = vand.u32 2147483647, %v543
        %v672 = vand.u32 2147483647, %v544
        %v673 = vand.u32 2147483647, %v545
        %v674 = vand.u32 2147483647, %v546
        %v675 = vand.u32 2147483647, %v547
        %v676 = vand.u32 2147483647, %v548
        %v677 = vand.u32 2147483647, %v549
        %v678 = vand.u32 2147483647, %v550
        %v679 = vand.u32 2147483647, %v551
        %v680 = vand.u32 2147483647, %v552
        %v681 = vand.u32 2147483647, %v553
        %v682 = vand.u32 2147483647, %v554
        %v683 = vand.u32 2147483647, %v555
        %v684 = vand.u32 2147483647, %v556
        %v685 = vand.u32 2147483647, %v557
        %v686 = vand.u32 2147483647, %v558
        %v687 = vand.u32 2147483647, %v559
        %v688 = vand.u32 2147483647, %v560
        %v689 = vand.u32 2147483647, %v561
        %v690 = vand.u32 2147483647, %v562
        %v691 = vand.u32 2147483647, %v563
        %v692 = vand.u32 2147483647, %v564
        %v693 = vand.u32 2147483647, %v565
        %v694 = vand.u32 2147483647, %v566
        %v695 = vand.u32 2147483647, %v567
        %v696 = vand.u32 2147483647, %v568
        %v697 = vadd.f32 %v569, %v573
        %v698 = vadd.f32 %v697, %v577
        %v699 = vadd.f32 %v698, %v581
        %v700 = vrot.slane %v699, 4
        %v701 = vadd.f32 %v699, %v700
        %v702 = vrot.slane %v701, 2
        %v703 = vadd.f32 %v701, %v702
        %v704 = vrot.slane %v703, 1
        %v705 = vadd.f32 %v703, %v704
        %v706 = vadd.f32 %v570, %v574
        %v707 = vadd.f32 %v706, %v578
        %v708 = vadd.f32 %v707, %v582
        %v709 = vrot.slane %v708, 4
        %v710 = vadd.f32 %v708, %v709
        %v711 = vrot.slane %v710, 2
        %v712 = vadd.f32 %v710, %v711
        %v713 = vrot.slane %v712, 1
        %v714 = vadd.f32 %v712, %v713
        %v715 = vadd.f32 %v571, %v575
        %v716 = vadd.f32 %v715, %v579
        %v717 = vadd.f32 %v716, %v583
        %v718 = vrot.slane %v717, 4
        %v719 = vadd.f32 %v717, %v718
        %v720 = vrot.slane %v719, 2
        %v721 = vadd.f32 %v719, %v720
        %v722 = vrot.slane %v721, 1
        %v723 = vadd.f32 %v721, %v722
        %v724 = vadd.f32 %v572, %v576
        %v725 = vadd.f32 %v724, %v580
        %v726 = vadd.f32 %v725, %v584
        %v727 = vrot.slane %v726, 4
        %v728 = vadd.f32 %v726, %v727
        %v729 = vrot.slane %v728, 2
        %v730 = vadd.f32 %v728, %v729
        %v731 = vrot.slane %v730, 1
        %v732 = vadd.f32 %v730, %v731
        %v733 = vadd.f32 %v585, %v589
        %v734 = vadd.f32 %v733, %v593
        %v735 = vadd.f32 %v734, %v597
        %v736 = vrot.slane %v735, 4
        %v737 = vadd.f32 %v735, %v736
        %v738 = vrot.slane %v737, 2
        %v739 = vadd.f32 %v737, %v738
        %v740 = vrot.slane %v739, 1
        %v741 = vadd.f32 %v739, %v740
        %v742 = vadd.f32 %v586, %v590
        %v743 = vadd.f32 %v742, %v594
        %v744 = vadd.f32 %v743, %v598
        %v745 = vrot.slane %v744, 4
        %v746 = vadd.f32 %v744, %v745
        %v747 = vrot.slane %v746, 2
        %v748 = vadd.f32 %v746, %v747
        %v749 = vrot.slane %v748, 1
        %v750 = vadd.f32 %v748, %v749
        %v751 = vadd.f32 %v587, %v591
        %v752 = vadd.f32 %v751, %v595
        %v753 = vadd.f32 %v752, %v599
        %v754 = vrot.slane %v753, 4
        %v755 = vadd.f32 %v753, %v754
        %v756 = vrot.slane %v755, 2
        %v757 = vadd.f32 %v755, %v756
        %v758 = vrot.slane %v757, 1
        %v759 = vadd.f32 %v757, %v758
        %v760 = vadd.f32 %v588, %v592
        %v761 = vadd.f32 %v760, %v596
        %v762 = vadd.f32 %v761, %v600
        %v763 = vrot.slane %v762, 4
        %v764 = vadd.f32 %v762, %v763
        %v765 = vrot.slane %v764, 2
        %v766 = vadd.f32 %v764, %v765
        %v767 = vrot.slane %v766, 1
        %v768 = vadd.f32 %v766, %v767
        %v769 = vadd.f32 %v601, %v605
        %v770 = vadd.f32 %v769, %v609
        %v771 = vadd.f32 %v770, %v613
        %v772 = vrot.slane %v771, 4
        %v773 = vadd.f32 %v771, %v772
        %v774 = vrot.slane %v773, 2
        %v775 = vadd.f32 %v773, %v774
        %v776 = vrot.slane %v775, 1
        %v777 = vadd.f32 %v775, %v776
        %v778 = vadd.f32 %v602, %v606
        %v779 = vadd.f32 %v778, %v610
        %v780 = vadd.f32 %v779, %v614
        %v781 = vrot.slane %v780, 4
        %v782 = vadd.f32 %v780, %v781
        %v783 = vrot.slane %v782, 2
        %v784 = vadd.f32 %v782, %v783
        %v785 = vrot.slane %v784, 1
        %v786 = vadd.f32 %v784, %v785
        %v787 = vadd.f32 %v603, %v607
        %v788 = vadd.f32 %v787, %v611
        %v789 = vadd.f32 %v788, %v615
        %v790 = vrot.slane %v789, 4
        %v791 = vadd.f32 %v789, %v790
        %v792 = vrot.slane %v791, 2
        %v793 = vadd.f32 %v791, %v792
        %v794 = vrot.slane %v793, 1
        %v795 = vadd.f32 %v793, %v794
        %v796 = vadd.f32 %v604, %v608
        %v797 = vadd.f32 %v796, %v612
        %v798 = vadd.f32 %v797, %v616
        %v799 = vrot.slane %v798, 4
        %v800 = vadd.f32 %v798, %v799
        %v801 = vrot.slane %v800, 2
        %v802 = vadd.f32 %v800, %v801
        %v803 = vrot.slane %v802, 1
        %v804 = vadd.f32 %v802, %v803
        %v805 = vadd.f32 %v617, %v621
        %v806 = vadd.f32 %v805, %v625
        %v807 = vadd.f32 %v806, %v629
        %v808 = vrot.slane %v807, 4
        %v809 = vadd.f32 %v807, %v808
        %v810 = vrot.slane %v809, 2
        %v811 = vadd.f32 %v809, %v810
        %v812 = vrot.slane %v811, 1
        %v813 = vadd.f32 %v811, %v812
        %v814 = vadd.f32 %v618, %v622
        %v815 = vadd.f32 %v814, %v626
        %v816 = vadd.f32 %v815, %v630
        %v817 = vrot.slane %v816, 4
        %v818 = vadd.f32 %v816, %v817
        %v819 = vrot.slane %v818, 2
        %v820 = vadd.f32 %v818, %v819
        %v821 = vrot.slane %v820, 1
        %v822 = vadd.f32 %v820, %v821
        %v823 = vadd.f32 %v619, %v623
        %v824 = vadd.f32 %v823, %v627
        %v825 = vadd.f32 %v824, %v631
        %v826 = vrot.slane %v825, 4
        %v827 = vadd.f32 %v825, %v826
        %v828 = vrot.slane %v827, 2
        %v829 = vadd.f32 %v827, %v828
        %v830 = vrot.slane %v829, 1
        %v831 = vadd.f32 %v829, %v830
        %v832 = vadd.f32 %v620, %v624
        %v833 = vadd.f32 %v832, %v628
        %v834 = vadd.f32 %v833, %v632
        %v835 = vrot.slane %v834, 4
        %v836 = vadd.f32 %v834, %v835
        %v837 = vrot.slane %v836, 2
        %v838 = vadd.f32 %v836, %v837
        %v839 = vrot.slane %v838, 1
        %v840 = vadd.f32 %v838, %v839
        %v841 = vadd.f32 %v633, %v637
        %v842 = vadd.f32 %v841, %v641
        %v843 = vadd.f32 %v842, %v645
        %v844 = vrot.slane %v843, 4
        %v845 = vadd.f32 %v843, %v844
        %v846 = vrot.slane %v845, 2
        %v847 = vadd.f32 %v845, %v846
        %v848 = vrot.slane %v847, 1
        %v849 = vadd.f32 %v847, %v848
        %v850 = vadd.f32 %v634, %v638
        %v851 = vadd.f32 %v850, %v642
        %v852 = vadd.f32 %v851, %v646
        %v853 = vrot.slane %v852, 4
        %v854 = vadd.f32 %v852, %v853
        %v855 = vrot.slane %v854, 2
        %v856 = vadd.f32 %v854, %v855
        %v857 = vrot.slane %v856, 1
        %v858 = vadd.f32 %v856, %v857
        %v859 = vadd.f32 %v635, %v639
        %v860 = vadd.f32 %v859, %v643
        %v861 = vadd.f32 %v860, %v647
        %v862 = vrot.slane %v861, 4
        %v863 = vadd.f32 %v861, %v862
        %v864 = vrot.slane %v863, 2
        %v865 = vadd.f32 %v863, %v864
        %v866 = vrot.slane %v865, 1
        %v867 = vadd.f32 %v865, %v866
        %v868 = vadd.f32 %v636, %v640
        %v869 = vadd.f32 %v868, %v644
        %v870 = vadd.f32 %v869, %v648
        %v871 = vrot.slane %v870, 4
        %v872 = vadd.f32 %v870, %v871
        %v873 = vrot.slane %v872, 2
        %v874 = vadd.f32 %v872, %v873
        %v875 = vrot.slane %v874, 1
        %v876 = vadd.f32 %v874, %v875
        %v877 = vadd.f32 %v649, %v653
        %v878 = vadd.f32 %v877, %v657
        %v879 = vadd.f32 %v878, %v661
        %v880 = vrot.slane %v879, 4
        %v881 = vadd.f32 %v879, %v880
        %v882 = vrot.slane %v881, 2
        %v883 = vadd.f32 %v881, %v882
        %v884 = vrot.slane %v883, 1
        %v885 = vadd.f32 %v883, %v884
        %v886 = vadd.f32 %v650, %v654
        %v887 = vadd.f32 %v886, %v658
        %v888 = vadd.f32 %v887, %v662
        %v889 = vrot.slane %v888, 4
        %v890 = vadd.f32 %v888, %v889
        %v891 = vrot.slane %v890, 2
        %v892 = vadd.f32 %v890, %v891
        %v893 = vrot.slane %v892, 1
        %v894 = vadd.f32 %v892, %v893
        %v895 = vadd.f32 %v651, %v655
        %v896 = vadd.f32 %v895, %v659
        %v897 = vadd.f32 %v896, %v663
        %v898 = vrot.slane %v897, 4
        %v899 = vadd.f32 %v897, %v898
        %v900 = vrot.slane %v899, 2
        %v901 = vadd.f32 %v899, %v900
        %v902 = vrot.slane %v901, 1
        %v903 = vadd.f32 %v901, %v902
        %v904 = vadd.f32 %v652, %v656
        %v905 = vadd.f32 %v904, %v660
        %v906 = vadd.f32 %v905, %v664
        %v907 = vrot.slane %v906, 4
        %v908 = vadd.f32 %v906, %v907
        %v909 = vrot.slane %v908, 2
        %v910 = vadd.f32 %v908, %v909
        %v911 = vrot.slane %v910, 1
        %v912 = vadd.f32 %v910, %v911
        %v913 = vadd.f32 %v665, %v669
        %v914 = vadd.f32 %v913, %v673
        %v915 = vadd.f32 %v914, %v677
        %v916 = vrot.slane %v915, 4
        %v917 = vadd.f32 %v915, %v916
        %v918 = vrot.slane %v917, 2
        %v919 = vadd.f32 %v917, %v918
        %v920 = vrot.slane %v919, 1
        %v921 = vadd.f32 %v919, %v920
        %v922 = vadd.f32 %v666, %v670
        %v923 = vadd.f32 %v922, %v674
        %v924 = vadd.f32 %v923, %v678
        %v925 = vrot.slane %v924, 4
        %v926 = vadd.f32 %v924, %v925
        %v927 = vrot.slane %v926, 2
        %v928 = vadd.f32 %v926, %v927
        %v929 = vrot.slane %v928, 1
        %v930 = vadd.f32 %v928, %v929
        %v931 = vadd.f32 %v667, %v671
        %v932 = vadd.f32 %v931, %v675
        %v933 = vadd.f32 %v932, %v679
        %v934 = vrot.slane %v933, 4
        %v935 = vadd.f32 %v933, %v934
        %v936 = vrot.slane %v935, 2
        %v937 = vadd.f32 %v935, %v936
        %v938 = vrot.slane %v937, 1
        %v939 = vadd.f32 %v937, %v938
        %v940 = vadd.f32 %v668, %v672
        %v941 = vadd.f32 %v940, %v676
        %v942 = vadd.f32 %v941, %v680
        %v943 = vrot.slane %v942, 4
        %v944 = vadd.f32 %v942, %v943
        %v945 = vrot.slane %v944, 2
        %v946 = vadd.f32 %v944, %v945
        %v947 = vrot.slane %v946, 1
        %v948 = vadd.f32 %v946, %v947
        %v949 = vadd.f32 %v681, %v685
        %v950 = vadd.f32 %v949, %v689
        %v951 = vadd.f32 %v950, %v693
        %v952 = vrot.slane %v951, 4
        %v953 = vadd.f32 %v951, %v952
        %v954 = vrot.slane %v953, 2
        %v955 = vadd.f32 %v953, %v954
        %v956 = vrot.slane %v955, 1
        %v957 = vadd.f32 %v955, %v956
        %v958 = vadd.f32 %v682, %v686
        %v959 = vadd.f32 %v958, %v690
        %v960 = vadd.f32 %v959, %v694
        %v961 = vrot.slane %v960, 4
        %v962 = vadd.f32 %v960, %v961
        %v963 = vrot.slane %v962, 2
        %v964 = vadd.f32 %v962, %v963
        %v965 = vrot.slane %v964, 1
        %v966 = vadd.f32 %v964, %v965
        %v967 = vadd.f32 %v683, %v687
        %v968 = vadd.f32 %v967, %v691
        %v969 = vadd.f32 %v968, %v695
        %v970 = vrot.slane %v969, 4
        %v971 = vadd.f32 %v969, %v970
        %v972 = vrot.slane %v971, 2
        %v973 = vadd.f32 %v971, %v972
        %v974 = vrot.slane %v973, 1
        %v975 = vadd.f32 %v973, %v974
        %v976 = vadd.f32 %v684, %v688
        %v977 = vadd.f32 %v976, %v692
        %v978 = vadd.f32 %v977, %v696
        %v979 = vrot.slane %v978, 4
        %v980 = vadd.f32 %v978, %v979
        %v981 = vrot.slane %v980, 2
        %v982 = vadd.f32 %v980, %v981
        %v983 = vrot.slane %v982, 1
        %v984 = vadd.f32 %v982, %v983
        %vm1017 = vcmask 1041409
        %v1018 = vsel %vm1017, %v741, %v705
        %vm1019 = vcmask 1042434
        %v1020 = vsel %vm1019, %v777, %v1018
        %vm1021 = vcmask 1043459
        %v1022 = vsel %vm1021, %v813, %v1020
        %vm1023 = vcmask 1044484
        %v1024 = vsel %vm1023, %v849, %v1022
        %vm1025 = vcmask 1045509
        %v1026 = vsel %vm1025, %v885, %v1024
        %vm1027 = vcmask 1046534
        %v1028 = vsel %vm1027, %v921, %v1026
        %vm1029 = vcmask 1047559
        %v1030 = vsel %vm1029, %v957, %v1028
        %v1031 = vsel %vm1017, %v750, %v714
        %v1032 = vsel %vm1019, %v786, %v1031
        %v1033 = vsel %vm1021, %v822, %v1032
        %v1034 = vsel %vm1023, %v858, %v1033
        %v1035 = vsel %vm1025, %v894, %v1034
        %v1036 = vsel %vm1027, %v930, %v1035
        %v1037 = vsel %vm1029, %v966, %v1036
        %v1038 = vsel %vm1017, %v759, %v723
        %v1039 = vsel %vm1019, %v795, %v1038
        %v1040 = vsel %vm1021, %v831, %v1039
        %v1041 = vsel %vm1023, %v867, %v1040
        %v1042 = vsel %vm1025, %v903, %v1041
        %v1043 = vsel %vm1027, %v939, %v1042
        %v1044 = vsel %vm1029, %v975, %v1043
        %v1045 = vsel %vm1017, %v768, %v732
        %v1046 = vsel %vm1019, %v804, %v1045
        %v1047 = vsel %vm1021, %v840, %v1046
        %v1048 = vsel %vm1023, %v876, %v1047
        %v1049 = vsel %vm1025, %v912, %v1048
        %v1050 = vsel %vm1027, %v948, %v1049
        %v1051 = vsel %vm1029, %v984, %v1050
        %1056 = vst [vmem:[%s222] sm:$0xff] %v1030
        %1057 = vst [vmem:[%s222 + $0x8] sm:$0xff] %v1037
        %1058 = vst [vmem:[%s222 + $0x10] sm:$0xff] %v1044
        %1059 = vst [vmem:[%s222 + $0x18] sm:$0xff] %v1051
        %v1060 = vrcp.pop %v705
        %v1061 = vmul.f32 1.0, %v1060
        %v1062 = vrcp.pop %v714
        %v1063 = vmul.f32 1.0, %v1062
        %v1064 = vrcp.pop %v723
        %v1065 = vmul.f32 1.0, %v1064
        %v1066 = vrcp.pop %v732
        %v1067 = vmul.f32 1.0, %v1066
        %v1068 = vrcp.pop %v741
        %v1069 = vmul.f32 1.0, %v1068
        %v1070 = vrcp.pop %v750
        %v1071 = vmul.f32 1.0, %v1070
        %v1072 = vrcp.pop %v759
        %v1073 = vmul.f32 1.0, %v1072
        %v1074 = vrcp.pop %v768
        %v1075 = vmul.f32 1.0, %v1074
        %v1076 = vrcp.pop %v777
        %v1077 = vmul.f32 1.0, %v1076
        %v1078 = vrcp.pop %v786
        %v1079 = vmul.f32 1.0, %v1078
        %v1080 = vrcp.pop %v795
        %v1081 = vmul.f32 1.0, %v1080
        %v1082 = vrcp.pop %v804
        %v1083 = vmul.f32 1.0, %v1082
        %v1084 = vrcp.pop %v813
        %v1085 = vmul.f32 1.0, %v1084
        %v1086 = vrcp.pop %v822
        %v1087 = vmul.f32 1.0, %v1086
        %v1088 = vrcp.pop %v831
        %v1089 = vmul.f32 1.0, %v1088
        %v1090 = vrcp.pop %v840
        %v1091 = vmul.f32 1.0, %v1090
        %v1092 = vrcp.pop %v849
        %v1093 = vmul.f32 1.0, %v1092
        %v1094 = vrcp.pop %v858
        %v1095 = vmul.f32 1.0, %v1094
        %v1096 = vrcp.pop %v867
        %v1097 = vmul.f32 1.0, %v1096
        %v1098 = vrcp.pop %v876
        %v1099 = vmul.f32 1.0, %v1098
        %v1100 = vrcp.pop %v885
        %v1101 = vmul.f32 1.0, %v1100
        %v1102 = vrcp.pop %v894
        %v1103 = vmul.f32 1.0, %v1102
        %v1104 = vrcp.pop %v903
        %v1105 = vmul.f32 1.0, %v1104
        %v1106 = vrcp.pop %v912
        %v1107 = vmul.f32 1.0, %v1106
        %v1108 = vrcp.pop %v921
        %v1109 = vmul.f32 1.0, %v1108
        %v1110 = vrcp.pop %v930
        %v1111 = vmul.f32 1.0, %v1110
        %v1112 = vrcp.pop %v939
        %v1113 = vmul.f32 1.0, %v1112
        %v1114 = vrcp.pop %v948
        %v1115 = vmul.f32 1.0, %v1114
        %v1116 = vrcp.pop %v957
        %v1117 = vmul.f32 1.0, %v1116
        %v1118 = vrcp.pop %v966
        %v1119 = vmul.f32 1.0, %v1118
        %v1120 = vrcp.pop %v975
        %v1121 = vmul.f32 1.0, %v1120
        %v1122 = vrcp.pop %v984
        %v1123 = vmul.f32 1.0, %v1122
        %v1156 = vsel %vm1017, %v1069, %v1061
        %v1157 = vsel %vm1019, %v1077, %v1156
        %v1158 = vsel %vm1021, %v1085, %v1157
        %v1159 = vsel %vm1023, %v1093, %v1158
        %v1160 = vsel %vm1025, %v1101, %v1159
        %v1161 = vsel %vm1027, %v1109, %v1160
        %v1162 = vsel %vm1029, %v1117, %v1161
        %v1163 = vsel %vm1017, %v1071, %v1063
        %v1164 = vsel %vm1019, %v1079, %v1163
        %v1165 = vsel %vm1021, %v1087, %v1164
        %v1166 = vsel %vm1023, %v1095, %v1165
        %v1167 = vsel %vm1025, %v1103, %v1166
        %v1168 = vsel %vm1027, %v1111, %v1167
        %v1169 = vsel %vm1029, %v1119, %v1168
        %v1170 = vsel %vm1017, %v1073, %v1065
        %v1171 = vsel %vm1019, %v1081, %v1170
        %v1172 = vsel %vm1021, %v1089, %v1171
        %v1173 = vsel %vm1023, %v1097, %v1172
        %v1174 = vsel %vm1025, %v1105, %v1173
        %v1175 = vsel %vm1027, %v1113, %v1174
        %v1176 = vsel %vm1029, %v1121, %v1175
        %v1177 = vsel %vm1017, %v1075, %v1067
        %v1178 = vsel %vm1019, %v1083, %v1177
        %v1179 = vsel %vm1021, %v1091, %v1178
        %v1180 = vsel %vm1023, %v1099, %v1179
        %v1181 = vsel %vm1025, %v1107, %v1180
        %v1182 = vsel %vm1027, %v1115, %v1181
        %v1183 = vsel %vm1029, %v1123, %v1182
        %1188 = vst [vmem:[%s229] sm:$0xff] %v1162
        %1189 = vst [vmem:[%s229 + $0x8] sm:$0xff] %v1169
        %1190 = vst [vmem:[%s229 + $0x10] sm:$0xff] %v1176
        %1191 = vst [vmem:[%s229 + $0x18] sm:$0xff] %v1183
        %s1192 = sand.u32 %s76, 1
        %s1193 = scalar_lea.sflag [#allocation4], %s1192
        %s1194 = sand.u32 %s76, 1
        %s1195 = smul.addr %s1194, 32
        %s1196 = scalar_lea.vmem [#allocation3], %s1195
        %s1197 = sand.u32 %s102, 1
        %s1198 = scalar_lea.sflag [#allocation6], %s1197
        %s1199 = sand.u32 %s102, 1
        %s1200 = smul.addr %s1199, 32
        %s1201 = scalar_lea.vmem [#allocation5], %s1200
        // Predicated region
        $region52: #{tpu_custom_call.1} parent=46 // pred_check
          %p1202 = pneg %p86
        $region53: #{tpu_custom_call.1} parent=46 // pred_check_branch
          %1204 = sbr.rel (%p1202) target = $region55
        $region54: #{tpu_custom_call.1} parent=46 // pred_region
          %s1205 = smul.u32 4, %s21
          %s1207 = ssub.s32 512, 512
          %1208 = vsyncadd %s1193, %s1207
          %s1209 = smul.addr %s1205, 128
          %s1210 = scalar_lea.hbm %s2, %s1209
          %s1212 = sshll.u32 %s1196, 4
          %s1213 = int_to_ptr.vmem [resolvable:$true] %s1212
          %1215 = dma.vmem_to_hbm [thread:$0]  %s1213, 512, %s1210, %s1193
        $region55: #{tpu_custom_call.1} parent=46 // pred_fallthru
          _
        // Predicated region
        $region56: #{tpu_custom_call.1} parent=46 // pred_check
          %p1216 = pneg %p112
        $region57: #{tpu_custom_call.1} parent=46 // pred_check_branch
          %1218 = sbr.rel (%p1216) target = $region59
        $region58: #{tpu_custom_call.1} parent=46 // pred_region
          %s1219 = smul.u32 4, %s21
          %s1221 = ssub.s32 512, 512
          %1222 = vsyncadd %s1198, %s1221
          %s1223 = smul.addr %s1219, 128
          %s1224 = scalar_lea.hbm %s3, %s1223
          %s1226 = sshll.u32 %s1201, 4
          %s1227 = int_to_ptr.vmem [resolvable:$true] %s1226
          %1229 = dma.vmem_to_hbm [thread:$0]  %s1227, 512, %s1224, %s1198
        $region59: #{tpu_custom_call.1} parent=46 // pred_fallthru
          _
      $region47: #{tpu_custom_call.1} parent=5 // pred_fallthru
        _
      %p1230 = scmp.le.s32.totalorder 2, %s16
      // Predicated region
      $region60: #{tpu_custom_call.1} parent=5 // pred_check
        %p1231 = pneg %p1230
      $region61: #{tpu_custom_call.1} parent=5 // pred_check_branch
        %1233 = sbr.rel (%p1231) target = $region63
      $region62: #{tpu_custom_call.1} parent=5 // pred_region
        %s1234 = ssub.s32 %s16, 2
        // Predicated region
        $region64: #{tpu_custom_call.1} parent=62 // pred_check
          %p1235 = pneg %p92
        $region65: #{tpu_custom_call.1} parent=62 // pred_check_branch
          %1237 = sbr.rel (%p1235) target = $region67
        $region66: #{tpu_custom_call.1} parent=62 // pred_region
          %s1238 = sand.u32 %s77, 1
          %s1239 = scalar_lea.sflag [#allocation4], %s1238
          %s1240 = sand.u32 %s77, 1
          %s1241 = smul.addr %s1240, 32
          %s1242 = scalar_lea.vmem [#allocation3], %s1241
          %1243 = dma.done %s1239, 512
        $region67: #{tpu_custom_call.1} parent=62 // pred_fallthru
          _
        // Predicated region
        $region68: #{tpu_custom_call.1} parent=62 // pred_check
          %p1244 = pneg %p118
        $region69: #{tpu_custom_call.1} parent=62 // pred_check_branch
          %1246 = sbr.rel (%p1244) target = $region71
        $region70: #{tpu_custom_call.1} parent=62 // pred_region
          %s1247 = sand.u32 %s103, 1
          %s1248 = scalar_lea.sflag [#allocation6], %s1247
          %s1249 = sand.u32 %s103, 1
          %s1250 = smul.addr %s1249, 32
          %s1251 = scalar_lea.vmem [#allocation5], %s1250
          %1252 = dma.done %s1248, 512
        $region71: #{tpu_custom_call.1} parent=62 // pred_fallthru
          _
      $region63: #{tpu_custom_call.1} parent=5 // pred_fallthru
        _
    $region6: #{tpu_custom_call.1} parent=1 // loop_footer
      %s20 = sadd.s32 1, %s16
    $region7: #{tpu_custom_call.1} parent=1 // loop_footer_branch
      %15 = sbr.rel target = $region3
    $region8: #{tpu_custom_call.1} parent=1 // loop_exit
      _
    %1253 = vsyncpa [#allocation4], 1
    %s1254 = scalar_lea.sflag [#allocation4], 1
    %1255 = vsyncpa %s1254, 1
    %1256 = vsyncpa [#allocation6], 1
    %s1257 = scalar_lea.sflag [#allocation6], 1
    %1258 = vsyncpa %s1257, 1

</llo_original>
